<compile_context>
chip_gen: v7x
topology: tpu7x:2x2x1
jax: 0.10.0
libtpu: 0.0.40
codegen_flags: <defaults>
</compile_context>

<pallas_src>
import math
import jax
import jax.numpy as jnp
from jax.experimental import pallas as pl
from jax.experimental.pallas import tpu as pltpu


def _round_up(x, m):
    return (x + m - 1) // m * m


def _cdiv(a, b):
    return (a + b - 1) // b


# ----------------------------------------------------------------------------
# Kernels
# ----------------------------------------------------------------------------
def _conv1x1_bn_relu_kernel_1k(x_ref, w_ref, b_ref, o_ref):
    # Single reduction step: no scratch, no accumulator round trip.
    # x_ref: (Cin, TS) bf16, w_ref: (TCO, Cin) bf16, b_ref: (TCO, 1) f32.
    y = jnp.dot(w_ref[...], x_ref[...], preferred_element_type=jnp.float32)
    y = y + b_ref[...]                      # folded-BN bias
    o_ref[...] = jnp.maximum(y, 0.0).astype(o_ref.dtype)


def _conv1x1_bn_relu_kernel_acc(x_ref, w_ref, b_ref, o_ref, acc_ref):
    # K-tiled reduction (Cin > 2048). acc_ref: (TCO, TS) f32 scratch.
    k = pl.program_id(3)
    contrib = jnp.dot(w_ref[...], x_ref[...],
                      preferred_element_type=jnp.float32)

    @pl.when(k == 0)
    def _init():                            # write first partial (no zero-init)
        acc_ref[...] = contrib

    @pl.when(k > 0)
    def _accum():
        acc_ref[...] += contrib

    @pl.when(k == pl.num_programs(3) - 1)
    def _finalize():
        y = acc_ref[...] + b_ref[...]
        o_ref[...] = jnp.maximum(y, 0.0).astype(o_ref.dtype)


# ----------------------------------------------------------------------------
# Tile / VMEM selection
# ----------------------------------------------------------------------------
def _vmem_limit_bytes():
    """Generation-gated VMEM limit (v5e/v6e: 128 MiB phys; v7x: 64 MiB phys)."""
    try:
        phys = int(pltpu.get_tpu_info().vmem_capacity_bytes)
    except Exception:
        phys = 64 * 1024 * 1024             # conservative fallback
    if phys >= 100 * 1024 * 1024:
        return 64 * 1024 * 1024             # v5e / v6e
    return 40 * 1024 * 1024                 # v7x (keep well under 64 MiB)


def _select_tiles(N, Cin, Cout, S, out_bytes, vmem_limit):
    budget = int(vmem_limit * 0.75)         # headroom for compiler scratch

    # ---- reduction (Cin) axis: single K step for all standard 1x1 convs.
    if Cin <= 2048:
        TK, Cin_pad, multi_k = Cin, Cin, False
    else:
        TK = 512
        Cin_pad = _round_up(Cin, TK)
        multi_k = True

    # ---- out-channel axis: hold the full folded weight resident when small,
    #      so W is never re-fetched across batch/spatial grid steps.
    w_full_bytes = _round_up(Cout, 8) * Cin_pad * 2
    if Cout <= 512 and w_full_bytes <= 4 * 1024 * 1024:
        TCO, Cout_pad = Cout, Cout          # full dim -> no Cout padding
    else:
        TCO = 256
        Cout_pad = _round_up(Cout, TCO)

    # ---- spatial (lane) axis: budget-driven, minimal padding.
    w_bytes = 2 * TCO * TK * 2                      # double-buffered bf16 W
    per_lane = 2 * TK * 2 + 2 * TCO * out_bytes     # X dbuf + out dbuf / lane
    if multi_k:
        per_lane += TCO * 4                         # f32 accumulator
    ts_cap = max(128, (budget - w_bytes) // per_lane)
    ts_cap = min(ts_cap, 4096)
    if S <= ts_cap:
        TS, S_pad = S, S                    # one full spatial tile, no padding
    else:
        best = None                         # multiples of 128, minimize padding
        for ts in range(128, (ts_cap // 128) * 128 + 1, 128):
            key = (_round_up(S, ts) - S, -ts)
            if best is None or key < best[0]:
                best = (key, ts)
        TS = best[1]
        S_pad = _round_up(S, TS)

    # ---- v7x megacore: make sure the parallel grid has >= 2 tiles.
    if N * (S_pad // TS) * (Cout_pad // TCO) == 1:
        if S > 128:
            TS = _round_up(_cdiv(S, 2), 128)
            S_pad = _round_up(S, TS)
        elif Cout >= 16:
            TCO = _round_up(_cdiv(Cout, 2), 8)
            Cout_pad = _round_up(Cout, TCO)

    return TK, Cin_pad, TCO, Cout_pad, TS, S_pad, multi_k


# ----------------------------------------------------------------------------
# Wrapper
# ----------------------------------------------------------------------------
def conv1x1_bn_relu(x_nchw, weight, gamma, beta, running_mean, running_var,
                    stride=1, eps=1e-3, out_dtype=None):
    """x_nchw: (N, Cin, H, W); weight: (Cout, Cin, 1, 1) (PyTorch conv layout).

    out_dtype: set to jnp.bfloat16 when the consumer accepts it to halve the
    output HBM stream; defaults to x's dtype.
    """
    N, Cin, H, W = x_nchw.shape
    Cout = weight.shape[0]
    out_dtype = x_nchw.dtype if out_dtype is None else out_dtype

    # Stride for a 1x1 conv == spatial subsampling (skip when stride == 1).
    if stride != 1:
        x_nchw = x_nchw[:, :, ::stride, ::stride]
    Ho, Wo = x_nchw.shape[2], x_nchw.shape[3]
    S = Ho * Wo

    # Fold eval-mode BatchNorm into the weights (scale) and a per-channel bias.
    inv_std = 1.0 / jnp.sqrt(running_var.astype(jnp.float32) + eps)
    scale = gamma.astype(jnp.float32) * inv_std                       # (Cout,)
    bias = beta.astype(jnp.float32) - running_mean.astype(jnp.float32) * scale
    w_mat = weight.reshape(Cout, Cin).astype(jnp.float32) * scale[:, None]

    out_bytes = jnp.dtype(out_dtype).itemsize
    vmem_limit = _vmem_limit_bytes()
    TK, Cin_pad, TCO, Cout_pad, TS, S_pad, multi_k = _select_tiles(
        N, Cin, Cout, S, out_bytes, vmem_limit)

    # NCHW-native operands (no transposes anywhere).  Cast to bf16 BEFORE
    # padding (half the pad-pass bytes); skip pads entirely when unneeded.
    x_bf = x_nchw.reshape(N, Cin, S).astype(jnp.bfloat16)
    if Cin_pad != Cin or S_pad != S:
        x_bf = jnp.pad(x_bf, ((0, 0), (0, Cin_pad - Cin), (0, S_pad - S)))
    w_bf = w_mat.astype(jnp.bfloat16)
    if Cout_pad != Cout or Cin_pad != Cin:
        w_bf = jnp.pad(w_bf, ((0, Cout_pad - Cout), (0, Cin_pad - Cin)))
    b_col = bias if Cout_pad == Cout else jnp.pad(bias, (0, Cout_pad - Cout))
    b_col = b_col.reshape(Cout_pad, 1)

    s_tiles = S_pad // TS
    c_tiles = Cout_pad // TCO

    if not multi_k:
        # ---- single-K fast path: no accumulator scratch at all.
        out = pl.pallas_call(
            _conv1x1_bn_relu_kernel_1k,
            out_shape=jax.ShapeDtypeStruct((N, Cout_pad, S_pad), out_dtype),
            grid_spec=pltpu.PrefetchScalarGridSpec(
                num_scalar_prefetch=0,
                grid=(N, s_tiles, c_tiles),
                in_specs=[
                    # X: (N, Cin, S_pad) -> block (Cin, TS)
                    pl.BlockSpec((pl.Squeezed(), TK, TS),
                                 lambda b, s, c: (b, 0, s)),
                    # W (BN-folded): (Cout_pad, Cin) -> block (TCO, Cin)
                    pl.BlockSpec((TCO, TK), lambda b, s, c: (c, 0)),
                    # bias: (Cout_pad, 1) -> block (TCO, 1)
                    pl.BlockSpec((TCO, 1), lambda b, s, c: (c, 0)),
                ],
                out_specs=pl.BlockSpec((pl.Squeezed(), TCO, TS),
                                       lambda b, s, c: (b, c, s)),
            ),
            compiler_params=pltpu.CompilerParams(
                dimension_semantics=("parallel", "parallel", "parallel"),
                vmem_limit_bytes=vmem_limit,
            ),
        )(x_bf, w_bf, b_col)
    else:
        # ---- K-tiled reduction path (Cin > 2048).
        out = pl.pallas_call(
            _conv1x1_bn_relu_kernel_acc,
            out_shape=jax.ShapeDtypeStruct((N, Cout_pad, S_pad), out_dtype),
            grid_spec=pltpu.PrefetchScalarGridSpec(
                num_scalar_prefetch=0,
                grid=(N, s_tiles, c_tiles, Cin_pad // TK),
                in_specs=[
                    pl.BlockSpec((pl.Squeezed(), TK, TS),
                                 lambda b, s, c, k: (b, k, s)),
                    pl.BlockSpec((TCO, TK), lambda b, s, c, k: (c, k)),
                    pl.BlockSpec((TCO, 1), lambda b, s, c, k: (c, 0)),
                ],
                out_specs=pl.BlockSpec((pl.Squeezed(), TCO, TS),
                                       lambda b, s, c, k: (b, c, s)),
                scratch_shapes=[pltpu.VMEM((TCO, TS), jnp.float32)],
            ),
            compiler_params=pltpu.CompilerParams(
                dimension_semantics=("parallel", "parallel", "parallel",
                                     "arbitrary"),
                vmem_limit_bytes=vmem_limit,
            ),
        )(x_bf, w_bf, b_col)

    # De-pad only when padding was actually introduced (often a no-op now).
    if Cout_pad != Cout or S_pad != S:
        out = out[:, :Cout, :S]
    return out.reshape(N, Cout, Ho, Wo)


if __name__ == "__main__":
    key = jax.random.PRNGKey(0)
    k_x, k_w, k_g, k_b, k_m, k_v = jax.random.split(key, 6)

    N, Cin, H, W = 2, 4, 16, 16
    Cout, stride = 8, 2
    eps = 0.001

    x = jax.random.normal(k_x, (N, Cin, H, W), dtype=jnp.float32)

    # Deterministic parameter init (shapes per nn.Conv2d / nn.BatchNorm2d).
    fan_in = Cin * 1 * 1
    bound = 1.0 / math.sqrt(fan_in)
    weight = jax.random.uniform(k_w, (Cout, Cin, 1, 1), minval=-bound,
                                maxval=bound, dtype=jnp.float32)
    gamma = jax.random.uniform(k_g, (Cout,), minval=0.5, maxval=1.5,
                               dtype=jnp.float32)
    beta = (jax.random.normal(k_b, (Cout,)) * 0.1).astype(jnp.float32)
    running_mean = (jax.random.normal(k_m, (Cout,)) * 0.1).astype(jnp.float32)
    running_var = jax.random.uniform(k_v, (Cout,), minval=0.5, maxval=1.5,
                                     dtype=jnp.float32)
    # TODO(synk): PyTorch BatchNorm in training mode uses batch statistics;
    # this kernel implements eval/inference-mode BN folded into scale+bias.

    out = conv1x1_bn_relu(x, weight, gamma, beta, running_mean, running_var,
                          stride=stride, eps=eps)
    out = jax.block_until_ready(out)
    assert out.shape == (N, Cout, H // stride, W // stride)

    # Reference 1 (tight): same bf16-quantized folded weights/inputs, f32 math.
    x_s = x[:, :, ::stride, ::stride]
    inv_std = 1.0 / jnp.sqrt(running_var + eps)
    scale = gamma * inv_std
    bias = beta - running_mean * scale
    w_fold = (weight.reshape(Cout, Cin) * scale[:, None]
              ).astype(jnp.bfloat16).astype(jnp.float32)
    x_q = x_s.astype(jnp.bfloat16).astype(jnp.float32)
    ref_q = jnp.einsum("nchw,oc->nohw", x_q, w_fold, precision="highest")
    ref_q = jnp.maximum(ref_q + bias[None, :, None, None], 0.0)
    assert jnp.allclose(out, ref_q, atol=1e-4, rtol=1e-4)

    # Reference 2 (loose): full-f32 module semantics (conv -> BN(eval) -> ReLU);
    # tolerance accounts for the bf16 MXU inputs (accumulation is f32).
    ref = jnp.einsum("nchw,oc->nohw", x_s, weight.reshape(Cout, Cin),
                     precision="highest")
    ref = (ref - running_mean[None, :, None, None]) * inv_std[None, :, None, None]
    ref = ref * gamma[None, :, None, None] + beta[None, :, None, None]
    ref = jnp.maximum(ref, 0.0)
    assert jnp.allclose(out, ref, atol=1e-1, rtol=5e-2)

    print("KERNEL_OK")
</pallas_src>

<mosaic_0001>
module attributes {stable_mosaic.version = 11 : i64} {
  func.func @_conv1x1_bn_relu_kernel_1k(%arg0: i32, %arg1: i32, %arg2: i32, %arg3: memref<1x4x64xbf16, #tpu.memory_space<vmem>>, %arg4: memref<8x4xbf16, #tpu.memory_space<vmem>>, %arg5: memref<8x1xf32, #tpu.memory_space<vmem>>, %arg6: memref<1x8x64xf32, #tpu.memory_space<vmem>>) attributes {dimension_semantics = [#tpu.dimension_semantics<parallel>, #tpu.dimension_semantics<parallel>, #tpu.dimension_semantics<parallel>], iteration_bounds = array<i64: 2, 1, 1>, scalar_prefetch = 0 : i64, scratch_operands = 0 : i64, tpu.core_type = #tpu.core_type<tc>, window_params = [{transform_indices = @transform_0, window_bounds = array<i64: 1, 4, 64>}, {transform_indices = @transform_1, window_bounds = array<i64: 8, 4>}, {transform_indices = @transform_2, window_bounds = array<i64: 8, 1>}, {transform_indices = @transform_3, window_bounds = array<i64: 1, 8, 64>}]} {
    %c0 = arith.constant 0 : index
    %c0_0 = arith.constant 0 : index
    %0 = vector.load %arg4[%c0, %c0_0] : memref<8x4xbf16, #tpu.memory_space<vmem>>, vector<8x4xbf16>
    %c0_1 = arith.constant 0 : index
    %c0_2 = arith.constant 0 : index
    %c0_3 = arith.constant 0 : index
    %1 = vector.load %arg3[%c0_1, %c0_2, %c0_3] : memref<1x4x64xbf16, #tpu.memory_space<vmem>>, vector<1x4x64xbf16>
    %2 = vector.shape_cast %1 : vector<1x4x64xbf16> to vector<4x64xbf16>
    %cst = arith.constant dense<0.000000e+00> : vector<8x64xf32>
    %3 = tpu.matmul %0, %2, %cst {dimension_numbers = #tpu.dot_dimension_numbers<[1], [0], [0], [1], [0, 0, 1, 1], [], []>} : vector<8x4xbf16>, vector<4x64xbf16>, vector<8x64xf32> -> vector<8x64xf32>
    %c0_4 = arith.constant 0 : index
    %c0_5 = arith.constant 0 : index
    %4 = vector.load %arg5[%c0_4, %c0_5] : memref<8x1xf32, #tpu.memory_space<vmem>>, vector<8x1xf32>
    %5 = vector.broadcast %4 : vector<8x1xf32> to vector<8x64xf32>
    %6 = arith.addf %3, %5 : vector<8x64xf32>
    %cst_6 = arith.constant 0.000000e+00 : f32
    %7 = vector.broadcast %cst_6 : f32 to vector<8x64xf32>
    %8 = arith.maximumf %6, %7 : vector<8x64xf32>
    %c0_7 = arith.constant 0 : index
    %c0_8 = arith.constant 0 : index
    %c0_9 = arith.constant 0 : index
    %9 = vector.load %arg6[%c0_7, %c0_8, %c0_9] : memref<1x8x64xf32, #tpu.memory_space<vmem>>, vector<1x8x64xf32>
    %10 = vector.shape_cast %9 : vector<1x8x64xf32> to vector<8x64xf32>
    %11 = vector.shape_cast %8 : vector<8x64xf32> to vector<1x8x64xf32>
    tpu.vector_store %arg6[%c0_7, %c0_8, %c0_9], %11 {strides = array<i32>} : memref<1x8x64xf32, #tpu.memory_space<vmem>>, vector<1x8x64xf32>,
    return
  }
  func.func @transform_0(%arg0: i32, %arg1: i32, %arg2: i32) -> (i32, i32, i32) {
    %c0_i32 = arith.constant 0 : i32
    %c0_i32_0 = arith.constant 0 : i32
    return %arg0, %c0_i32, %arg1 : i32, i32, i32
  }
  func.func @transform_1(%arg0: i32, %arg1: i32, %arg2: i32) -> (i32, i32) {
    %c0_i32 = arith.constant 0 : i32
    %c0_i32_0 = arith.constant 0 : i32
    return %arg2, %c0_i32 : i32, i32
  }
  func.func @transform_2(%arg0: i32, %arg1: i32, %arg2: i32) -> (i32, i32) {
    %c0_i32 = arith.constant 0 : i32
    %c0_i32_0 = arith.constant 0 : i32
    return %arg2, %c0_i32 : i32, i32
  }
  func.func @transform_3(%arg0: i32, %arg1: i32, %arg2: i32) -> (i32, i32, i32) {
    %c0_i32 = arith.constant 0 : i32
    return %arg0, %arg2, %arg1 : i32, i32, i32
  }
}

</mosaic_0001>

<llo_original>
// kernel: tpu_custom_call.1
$region0: #{tpu_custom_call.1}
  #allocation0 [shape = 'u32[]', space=smem, size = 0x4, offset = 0x4, fixed_abs, tag = 'smem constant byte address 0x4 - core index']
  #allocation1 [shape = 'u32[144,128]{1,0:T(1,128)}', space=vmem, size = 0x12000, scoped, tag = 'internal scratch']
  %s0 = inlined_call_operand.vmem [shape: bf16[2,4,64], index: 0, kind: input, shape index: {}]
  %s1 = inlined_call_operand.vmem [shape: bf16[8,4], index: 1, kind: input, shape index: {}]
  %s2 = inlined_call_operand.vmem [shape: f32[8,1], index: 2, kind: input, shape index: {}]
  %s3 = inlined_call_operand.hbm [shape: f32[2,8,64], index: 3, kind: output, shape index: {}]
  %s4 = sld [smem:[#allocation0]]
  $region45: #{tpu_custom_call.1} parent=0
    _
  %s6 = ssub.s32 1, %s4
  %s7 = scalar_select 0, %s6, %s4
  $region1: #{tpu_custom_call.1} parent=0
    #allocation2 [shape = 'u8[8192]{0}', space=vmem, size = 0x2000, scoped, tag = 'output window, operand 0']
    #allocation3 [shape = 's32[2]{0}', space=sflag, size = 0x8, scoped, tag = 'scoped memory for tpu_custom_call.1']
    %8 = vsyncpa [#allocation3], 0
    %s9 = scalar_lea.sflag [#allocation3], 1
    %10 = vsyncpa %s9, 0
    loop: start=0, step=1, limit=4
    $region2: #{tpu_custom_call.1} parent=1 // loop_pre_header
      _
    $region3: #{tpu_custom_call.1} parent=1 // loop_header
      %s12 = sphi 0, %s16
      %p13 = scmp.ge.s32.totalorder %s12, 4
      %s19 = sphi 0, %s38
      %s20 = sphi 0, %s34
      %s21 = sphi 0, %s30
      %s22 = sphi 0, %s19
      %s23 = sphi 0, %s20
      %s24 = sphi 0, %s21
      %s25 = sphi 0, %s22
      %s26 = sphi 0, %s23
      %s27 = sphi 0, %s24
      %s43 = sphi 0, %s45
      %s46 = sphi 0, %s43
      %s47 = sphi 0, %s46
      %s63 = sphi 0, %s47
      %s69 = sphi 0, %s71
      %s72 = sphi 0, %s69
      %s73 = sphi 0, %s72
      %s89 = sphi 0, %s73
      %s95 = sphi 0, %s97
      %s98 = sphi 0, %s95
      %s99 = sphi 0, %s98
      %s115 = sphi 0, %s99
      %s125 = sphi 0, %s127
      %s128 = sphi 0, %s125
      %s129 = sphi 0, %s128
      %s145 = sphi 0, %s129
    $region4: #{tpu_custom_call.1} parent=1 // loop_header_branch
      %15 = sbr.rel (%p13) target = $region8
    $region5: #{tpu_custom_call.1} parent=1 // loop_body
      %s17 = ssub.s32 %s12, 1
      %s18 = ssub.s32 %s12, 2
      %s28 = sadd.s32 1, %s21
      %p29 = scmp.ge.s32.totalorder %s28, 1
      %s30 = scalar_select %p29, 0, %s28
      %s31 = sadd.s32 1, %s20
      %s32 = scalar_select %p29, %s31, %s20
      %p33 = scmp.ge.s32.totalorder %s32, 1
      %s34 = scalar_select %p33, 0, %s32
      %s35 = sadd.s32 1, %s19
      %s36 = scalar_select %p33, %s35, %s19
      %p37 = scmp.ge.s32.totalorder %s36, 2
      %s38 = scalar_select %p37, 0, %s36
      %s39 = ssub.s32 %s19, %s38
      %s40 = ssub.s32 %s20, %s34
      %s41 = sor.u32 %s39, %s40
      %p42 = scmp.eq.s32.totalorder %s41, 0
      %s44 = sadd.s32 %s43, 1
      %s45 = scalar_select %p42, %s43, %s44
      %p48 = pneg %p42
      %p49 = scmp.eq.s32.totalorder %s12, 1
      %p50 = por %p48, %p49
      %p51 = scmp.ne.s32.totalorder %s43, %s46
      %p52 = scmp.eq.s32.totalorder %s12, 0
      %p53 = por %p51, %p52
      %p54 = scmp.ne.s32.totalorder %s43, %s46
      %p55 = scmp.eq.s32.totalorder %s17, 1
      %p56 = por %p54, %p55
      %p57 = scmp.ne.s32.totalorder %s46, %s47
      %p58 = scmp.eq.s32.totalorder %s17, 0
      %p59 = por %p57, %p58
      %p60 = scmp.ne.s32.totalorder %s46, %s47
      %p61 = scmp.eq.s32.totalorder %s18, 1
      %p62 = por %p60, %p61
      %p64 = scmp.ne.s32.totalorder %s47, %s63
      %p65 = scmp.eq.s32.totalorder %s18, 0
      %p66 = por %p64, %p65
      %s67 = ssub.s32 %s21, %s30
      %p68 = scmp.eq.s32.totalorder %s67, 0
      %s70 = sadd.s32 %s69, 1
      %s71 = scalar_select %p68, %s69, %s70
      %p74 = pneg %p68
      %p75 = scmp.eq.s32.totalorder %s12, 1
      %p76 = por %p74, %p75
      %p77 = scmp.ne.s32.totalorder %s69, %s72
      %p78 = scmp.eq.s32.totalorder %s12, 0
      %p79 = por %p77, %p78
      %p80 = scmp.ne.s32.totalorder %s69, %s72
      %p81 = scmp.eq.s32.totalorder %s17, 1
      %p82 = por %p80, %p81
      %p83 = scmp.ne.s32.totalorder %s72, %s73
      %p84 = scmp.eq.s32.totalorder %s17, 0
      %p85 = por %p83, %p84
      %p86 = scmp.ne.s32.totalorder %s72, %s73
      %p87 = scmp.eq.s32.totalorder %s18, 1
      %p88 = por %p86, %p87
      %p90 = scmp.ne.s32.totalorder %s73, %s89
      %p91 = scmp.eq.s32.totalorder %s18, 0
      %p92 = por %p90, %p91
      %s93 = ssub.s32 %s21, %s30
      %p94 = scmp.eq.s32.totalorder %s93, 0
      %s96 = sadd.s32 %s95, 1
      %s97 = scalar_select %p94, %s95, %s96
      %p100 = pneg %p94
      %p101 = scmp.eq.s32.totalorder %s12, 1
      %p102 = por %p100, %p101
      %p103 = scmp.ne.s32.totalorder %s95, %s98
      %p104 = scmp.eq.s32.totalorder %s12, 0
      %p105 = por %p103, %p104
      %p106 = scmp.ne.s32.totalorder %s95, %s98
      %p107 = scmp.eq.s32.totalorder %s17, 1
      %p108 = por %p106, %p107
      %p109 = scmp.ne.s32.totalorder %s98, %s99
      %p110 = scmp.eq.s32.totalorder %s17, 0
      %p111 = por %p109, %p110
      %p112 = scmp.ne.s32.totalorder %s98, %s99
      %p113 = scmp.eq.s32.totalorder %s18, 1
      %p114 = por %p112, %p113
      %p116 = scmp.ne.s32.totalorder %s99, %s115
      %p117 = scmp.eq.s32.totalorder %s18, 0
      %p118 = por %p116, %p117
      %s119 = ssub.s32 %s19, %s38
      %s120 = ssub.s32 %s21, %s30
      %s121 = sor.u32 %s119, %s120
      %s122 = ssub.s32 %s20, %s34
      %s123 = sor.u32 %s121, %s122
      %p124 = scmp.eq.s32.totalorder %s123, 0
      %s126 = sadd.s32 %s125, 1
      %s127 = scalar_select %p124, %s125, %s126
      %p130 = pneg %p124
      %p131 = scmp.eq.s32.totalorder %s12, 1
      %p132 = por %p130, %p131
      %p133 = scmp.ne.s32.totalorder %s125, %s128
      %p134 = scmp.eq.s32.totalorder %s12, 0
      %p135 = por %p133, %p134
      %p136 = scmp.ne.s32.totalorder %s125, %s128
      %p137 = scmp.eq.s32.totalorder %s17, 1
      %p138 = por %p136, %p137
      %p139 = scmp.ne.s32.totalorder %s128, %s129
      %p140 = scmp.eq.s32.totalorder %s17, 0
      %p141 = por %p139, %p140
      %p142 = scmp.ne.s32.totalorder %s128, %s129
      %p143 = scmp.eq.s32.totalorder %s18, 1
      %p144 = por %p142, %p143
      %p146 = scmp.ne.s32.totalorder %s129, %s145
      %p147 = scmp.eq.s32.totalorder %s18, 0
      %p148 = por %p146, %p147
      %p149 = scmp.le.s32.totalorder 1, %s12
      %p150 = scmp.lt.s32.totalorder %s12, 3
      %p151 = pnand %p149, %p150
      %p152 = pneg %p151
      // Predicated region
      $region9: #{tpu_custom_call.1} parent=5 // pred_check
        _
      $region10: #{tpu_custom_call.1} parent=5 // pred_check_branch
        %154 = sbr.rel (%p151) target = $region12
      $region11: #{tpu_custom_call.1} parent=5 // pred_region
        %s155 = ssub.s32 %s12, 1
        // Predicated region
        $region13: #{tpu_custom_call.1} parent=11 // pred_check
          %p156 = pneg %p85
        $region14: #{tpu_custom_call.1} parent=11 // pred_check_branch
          %158 = sbr.rel (%p156) target = $region16
        $region15: #{tpu_custom_call.1} parent=11 // pred_region
          %p159 = scmp.lt.s32.totalorder %s24, 0
          %s160 = scalar_select %p159, %s24, 0
          %s161 = smul.addr %s160, 4
          %s162 = scalar_lea.vmem %s1, %s161
        $region16: #{tpu_custom_call.1} parent=11 // pred_fallthru
          _
        // Predicated region
        $region17: #{tpu_custom_call.1} parent=11 // pred_check
          %p163 = pneg %p111
        $region18: #{tpu_custom_call.1} parent=11 // pred_check_branch
          %165 = sbr.rel (%p163) target = $region20
        $region19: #{tpu_custom_call.1} parent=11 // pred_region
          %p166 = scmp.lt.s32.totalorder %s24, 0
          %s167 = scalar_select %p166, %s24, 0
          %s168 = smul.addr %s167, 8
          %s169 = scalar_lea.vmem %s2, %s168
        $region20: #{tpu_custom_call.1} parent=11 // pred_fallthru
          _
      $region12: #{tpu_custom_call.1} parent=5 // pred_fallthru
        _
      %p170 = scmp.lt.s32.totalorder %s12, 2
      // Predicated region
      $region21: #{tpu_custom_call.1} parent=5 // pred_check
        %p171 = pneg %p170
      $region22: #{tpu_custom_call.1} parent=5 // pred_check_branch
        %173 = sbr.rel (%p171) target = $region24
      $region23: #{tpu_custom_call.1} parent=5 // pred_region
        // Predicated region
        $region25: #{tpu_custom_call.1} parent=23 // pred_check
          %p174 = pneg %p53
        $region26: #{tpu_custom_call.1} parent=23 // pred_check_branch
          %176 = sbr.rel (%p174) target = $region28
        $region27: #{tpu_custom_call.1} parent=23 // pred_region
          %p177 = scmp.lt.s32.totalorder %s19, 1
          %s178 = scalar_select %p177, %s19, 1
          %p179 = scmp.lt.s32.totalorder %s20, 0
          %s180 = scalar_select %p179, %s20, 0
          %s181 = sadd.s32 %s180, %s178
          %s182 = smul.addr %s181, 2
          %s183 = scalar_lea.vmem %s0, %s182
        $region28: #{tpu_custom_call.1} parent=23 // pred_fallthru
          _
      $region24: #{tpu_custom_call.1} parent=5 // pred_fallthru
        _
      %p184 = scmp.le.s32.totalorder 1, %s12
      %p185 = scmp.lt.s32.totalorder %s12, 3
      %p186 = pnand %p184, %p185
      %p187 = pneg %p186
      // Predicated region
      $region29: #{tpu_custom_call.1} parent=5 // pred_check
        _
      $region30: #{tpu_custom_call.1} parent=5 // pred_check_branch
        %189 = sbr.rel (%p186) target = $region32
      $region31: #{tpu_custom_call.1} parent=5 // pred_region
        %s190 = ssub.s32 %s12, 1
        %p191 = scmp.lt.s32.totalorder %s22, 1
        %s192 = scalar_select %p191, %s22, 1
        %p193 = scmp.lt.s32.totalorder %s23, 0
        %s194 = scalar_select %p193, %s23, 0
        %s195 = sadd.s32 %s194, %s192
        %s196 = smul.addr %s195, 2
        %s197 = scalar_lea.vmem %s0, %s196
        %p198 = pneg %p59
        %p199 = pneg %p56
        %p200 = scmp.lt.s32.totalorder %s24, 0
        %s201 = scalar_select %p200, %s24, 0
        %s202 = smul.addr %s201, 4
        %s203 = scalar_lea.vmem %s1, %s202
        %p204 = pneg %p85
        %p205 = pneg %p82
        %p206 = scmp.lt.s32.totalorder %s24, 0
        %s207 = scalar_select %p206, %s24, 0
        %s208 = smul.addr %s207, 8
        %s209 = scalar_lea.vmem %s2, %s208
        %p210 = pneg %p111
        %p211 = pneg %p108
        %p212 = pneg %p141
        %p213 = pneg %p138
        %s214 = sand.u32 %s128, 1
        %s215 = scalar_lea.sflag [#allocation3], %s214
        %s216 = sand.u32 %s128, 1
        %s217 = smul.addr %s216, 8
        %s218 = scalar_lea.vmem [#allocation2], %s217
        %p219 = scmp.lt.s32.totalorder %s22, 1
        %s220 = scalar_select %p219, %s22, 1
        %p221 = scmp.lt.s32.totalorder %s23, 0
        %s222 = scalar_select %p221, %s23, 0
        %s223 = sadd.s32 %s222, %s220
        %s224 = smul.addr %s223, 2
        %s225 = scalar_lea.vmem %s0, %s224
        %p226 = scmp.lt.s32.totalorder %s24, 0
        %s227 = scalar_select %p226, %s24, 0
        %s228 = smul.addr %s227, 4
        %s229 = scalar_lea.vmem %s1, %s228
        %p230 = scmp.lt.s32.totalorder %s24, 0
        %s231 = scalar_select %p230, %s24, 0
        %s232 = smul.addr %s231, 8
        %s233 = scalar_lea.vmem %s2, %s232
        %v235 = vld [vmem:[%s229] sm:$0xf]
        %v236 = vld [vmem:[%s225] sm:$0x3]
        %v237 = vld [vmem:[%s233] sm:$0xff]
        %239 = vset.pattern.permute.xlu0 0
        %240 = vperm.xlu0 %239, %v237
        %v241 = vpop.permute.xlu0 %240
        %vm243 = vcmask 31744
        %v245 = vsel %vm243, %v235, 0
        %vm247 = vcmask 1041408
        %v249 = vsel %vm247, %v236, 0
        %251 = vmatprep.subr.bf16.mxu0 0
        %252 = vmatpush1.bf16.msra.mxu0 %v249
        %253 = vmatprep.subr.bf16.mxu0 0
        %254 = vmatpush1.bf16.msra.mxu0 0
        %255 = vmatprep.subr.bf16.mxu0 0
        %256 = vmatpush1.bf16.msra.mxu0 0
        %257 = vmatprep.subr.bf16.mxu0 0
        %258 = vmatpush1.bf16.msra.mxu0 0
        %259 = vmatprep.subr.bf16.mxu0 0
        %260 = vmatpush1.bf16.msra.mxu0 0
        %261 = vmatprep.subr.bf16.mxu0 0
        %262 = vmatpush1.bf16.msra.mxu0 0
        %263 = vmatprep.subr.bf16.mxu0 0
        %264 = vmatpush1.bf16.msra.mxu0 0
        %265 = vmatprep.subr.bf16.mxu0 0
        %266 = vmatpush1.bf16.msra.mxu0 0
        %267 = vmatprep.subr.bf16.mxu0 0
        %268 = vmatpush1.bf16.msra.mxu0 0
        %269 = vmatprep.subr.bf16.mxu0 0
        %270 = vmatpush1.bf16.msra.mxu0 0
        %271 = vmatprep.subr.bf16.mxu0 0
        %272 = vmatpush1.bf16.msra.mxu0 0
        %273 = vmatprep.subr.bf16.mxu0 0
        %274 = vmatpush1.bf16.msra.mxu0 0
        %275 = vmatprep.subr.bf16.mxu0 0
        %276 = vmatpush1.bf16.msra.mxu0 0
        %277 = vmatprep.subr.bf16.mxu0 0
        %278 = vmatpush1.bf16.msra.mxu0 0
        %279 = vmatprep.subr.bf16.mxu0 0
        %280 = vmatpush1.bf16.msra.mxu0 0
        %281 = vmatprep.subr.bf16.mxu0 0
        %282 = vmatpush1.bf16.msra.mxu0 0
        %283 = vmatprep.mubr.bf16.mxu0 0
        %284 = vmatmul.mubr.bf16.gmra.mrb[0].mxu0 %v245
        %v285 = vpop.f32.mrb[0].mxu0
        %v286 = vadd.f32 %v241, %v285
        %v287 = vpop.f32.mrb[0].mxu0
        %v288 = vpop.f32.mrb[0].mxu0
        %v289 = vpop.f32.mrb[0].mxu0
        %290 = vdwg.mxu0
        %v291 = vmax.f32 %v286, 0.0
        %vm292 = vcmask 523264
        %293 = vst.msk [vmem:[%s218] sm:$0xff] %vm292, %v291
        %s294 = sand.u32 %s128, 1
        %s295 = scalar_lea.sflag [#allocation3], %s294
        %s296 = sand.u32 %s128, 1
        %s297 = smul.addr %s296, 8
        %s298 = scalar_lea.vmem [#allocation2], %s297
        // Predicated region
        $region33: #{tpu_custom_call.1} parent=31 // pred_check
          %p299 = pneg %p138
        $region34: #{tpu_custom_call.1} parent=31 // pred_check_branch
          %301 = sbr.rel (%p299) target = $region36
        $region35: #{tpu_custom_call.1} parent=31 // pred_region
          %s303 = ssub.s32 128, 128
          %304 = vsyncadd %s295, %s303
          %s305 = sadd.s32 %s23, %s24
          %s306 = sadd.s32 %s305, %s22
          %s307 = smul.addr %s306, 128
          %s308 = scalar_lea.hbm %s3, %s307
          %s310 = sshll.u32 %s298, 4
          %s311 = int_to_ptr.vmem [resolvable:$true] %s310
          %313 = dma.vmem_to_hbm [thread:$0]  %s311, 128, %s308, %s295
        $region36: #{tpu_custom_call.1} parent=31 // pred_fallthru
          _
      $region32: #{tpu_custom_call.1} parent=5 // pred_fallthru
        _
      %p314 = scmp.le.s32.totalorder 2, %s12
      // Predicated region
      $region37: #{tpu_custom_call.1} parent=5 // pred_check
        %p315 = pneg %p314
      $region38: #{tpu_custom_call.1} parent=5 // pred_check_branch
        %317 = sbr.rel (%p315) target = $region40
      $region39: #{tpu_custom_call.1} parent=5 // pred_region
        %s318 = ssub.s32 %s12, 2
        // Predicated region
        $region41: #{tpu_custom_call.1} parent=39 // pred_check
          %p319 = pneg %p144
        $region42: #{tpu_custom_call.1} parent=39 // pred_check_branch
          %321 = sbr.rel (%p319) target = $region44
        $region43: #{tpu_custom_call.1} parent=39 // pred_region
          %s322 = sand.u32 %s129, 1
          %s323 = scalar_lea.sflag [#allocation3], %s322
          %s324 = sand.u32 %s129, 1
          %s325 = smul.addr %s324, 8
          %s326 = scalar_lea.vmem [#allocation2], %s325
          %327 = dma.done %s323, 128
        $region44: #{tpu_custom_call.1} parent=39 // pred_fallthru
          _
      $region40: #{tpu_custom_call.1} parent=5 // pred_fallthru
        _
    $region6: #{tpu_custom_call.1} parent=1 // loop_footer
      %s16 = sadd.s32 1, %s12
    $region7: #{tpu_custom_call.1} parent=1 // loop_footer_branch
      %11 = sbr.rel target = $region3
    $region8: #{tpu_custom_call.1} parent=1 // loop_exit
      _
    %328 = vsyncpa [#allocation3], 1
    %s329 = scalar_lea.sflag [#allocation3], 1
    %330 = vsyncpa %s329, 1

</llo_original>
